<compile_context>
chip_gen: v7x
topology: tpu7x:2x2x1
jax: 0.10.0
libtpu: 0.0.40
codegen_flags: <defaults>
</compile_context>

<pallas_src>
import jax
import jax.numpy as jnp
from jax.experimental import pallas as pl
from jax.experimental.pallas import tpu as pltpu


_LANES = 128                # last-dim width: full vreg -> unmasked stores
_MAX_TILE_ROWS = 8192       # 8192 * 128 * 4 B = 4 MiB per f32 buffer
_MIN_PALLAS_ELEMS = 65536   # below this, plain XLA is faster (fixed overhead)


def _linreg_kernel(params_ref, x_ref, o_ref):
    # params_ref: (2,) f32 in SMEM -> [weight, bias].
    # x_ref / o_ref: (tile_rows, 128) f32 tiles in VMEM.
    w = params_ref[0]
    b = params_ref[1]
    o_ref[...] = x_ref[...] * w + b


def _round_up(v, m):
    return ((v + m - 1) // m) * m


def linear_regression_forward(x, weight, bias, *,
                              min_pallas_elems=_MIN_PALLAS_ELEMS):
    """x: (B, 1) f32, weight: (1, 1) f32, bias: (1,) f32 -> (B, 1) f32."""
    B, F = x.shape
    assert F == 1 and weight.shape == (1, 1) and bias.shape == (1,)

    n = B
    # Small inputs: a single fused XLA elementwise op beats any custom-call
    # launch + layout plumbing.
    if n < min_pallas_elems:
        return x * weight[0, 0] + bias[0]

    # Pack scalar params into one (2,) SMEM operand: [w, b].
    params = jnp.concatenate(
        [weight.reshape(1), bias.reshape(1)]).astype(x.dtype)

    # Flatten to a lane-dense (rows, 128) slab. Row-major reshape preserves
    # element order; pad only to the 128-lane boundary (<=127 elements),
    # which is a no-op for 128-aligned batches.
    flat = x.reshape(-1)
    rows = pl.cdiv(n, _LANES)
    n_pad = rows * _LANES
    if n_pad != n:
        flat = jnp.pad(flat, (0, n_pad - n))
    slab = flat.reshape(rows, _LANES)

    # Tile rows: cap at 4 MiB per buffer, but always split into >=2 grid
    # steps so a v7x megacore can run both TensorCores; ragged last block is
    # fine for an elementwise op.
    tile_rows = max(8, min(_MAX_TILE_ROWS, _round_up(pl.cdiv(rows, 2), 8)))
    grid = (pl.cdiv(rows, tile_rows),)

    out = pl.pallas_call(
        _linreg_kernel,
        out_shape=jax.ShapeDtypeStruct((rows, _LANES), x.dtype),
        grid_spec=pl.GridSpec(
            grid=grid,
            in_specs=[
                pl.BlockSpec(memory_space=pltpu.SMEM),               # [w, b]
                pl.BlockSpec((tile_rows, _LANES), lambda i: (i, 0)),  # x slab
            ],
            out_specs=pl.BlockSpec((tile_rows, _LANES), lambda i: (i, 0)),
        ),
        compiler_params=pltpu.CompilerParams(
            dimension_semantics=("parallel",),
            vmem_limit_bytes=48 << 20,
        ),
    )(params, slab)

    # Undo the lane-dense reshape; slice only when padding was added.
    y = out.reshape(-1)
    if n_pad != n:
        y = y[:n]
    return y.reshape(B, 1)


if __name__ == "__main__":
    key = jax.random.PRNGKey(0)
    k_w, k_b, k1, k2, k3 = jax.random.split(key, 5)

    # Deterministic parameter init mimicking nn.Linear(1, 1)'s U(-1, 1) range
    # (bound = 1/sqrt(in_features) = 1.0).
    weight = jax.random.uniform(
        k_w, (1, 1), dtype=jnp.float32, minval=-1.0, maxval=1.0)
    bias = jax.random.uniform(
        k_b, (1,), dtype=jnp.float32, minval=-1.0, maxval=1.0)

    def ref(xv):
        return xv @ weight.T + bias

    # 1) Tiny batch (typical usage of this module): XLA fast path.
    x1 = jax.random.normal(k1, (8, 1), dtype=jnp.float32)
    y1 = linear_regression_forward(x1, weight, bias)
    jax.block_until_ready(y1)
    assert jnp.allclose(y1, ref(x1), atol=1e-6), "mismatch (B=8, XLA path)"

    # 2) Small misaligned batch, Pallas path forced: exercises 128-lane
    #    padding, ragged last block, and the 2-step parallel grid.
    x2 = jax.random.normal(k2, (5000, 1), dtype=jnp.float32)
    y2 = linear_regression_forward(x2, weight, bias, min_pallas_elems=0)
    jax.block_until_ready(y2)
    assert jnp.allclose(y2, ref(x2), atol=1e-6), "mismatch (B=5000, Pallas)"

    # 3) 128-aligned batch above the threshold: default Pallas path with a
    #    fully zero-copy wrapper (no pad, no slice).
    x3 = jax.random.normal(k3, (131072, 1), dtype=jnp.float32)
    y3 = linear_regression_forward(x3, weight, bias)
    jax.block_until_ready(y3)
    assert jnp.allclose(y3, ref(x3), atol=1e-6), "mismatch (B=131072, Pallas)"

    print("KERNEL_OK")
</pallas_src>

<mosaic_0001>
module attributes {stable_mosaic.version = 11 : i64} {
  func.func @_linreg_kernel(%arg0: i32, %arg1: memref<2xf32, #tpu.memory_space<smem>>, %arg2: memref<24x128xf32, #tpu.memory_space<vmem>>, %arg3: memref<24x128xf32, #tpu.memory_space<vmem>>) attributes {dimension_semantics = [#tpu.dimension_semantics<parallel>], iteration_bounds = array<i64: 2>, scalar_prefetch = 0 : i64, scratch_operands = 0 : i64, tpu.core_type = #tpu.core_type<tc>, window_params = [{transform_indices = @transform_0, window_bounds = array<i64: 2>}, {transform_indices = @transform_1, window_bounds = array<i64: 24, 128>}, {transform_indices = @transform_2, window_bounds = array<i64: 24, 128>}]} {
    %c0 = arith.constant 0 : index
    %0 = memref.load %arg1[%c0] : memref<2xf32, #tpu.memory_space<smem>>
    %c1 = arith.constant 1 : index
    %1 = memref.load %arg1[%c1] : memref<2xf32, #tpu.memory_space<smem>>
    %c0_0 = arith.constant 0 : index
    %c0_1 = arith.constant 0 : index
    %2 = vector.load %arg2[%c0_0, %c0_1] : memref<24x128xf32, #tpu.memory_space<vmem>>, vector<24x128xf32>
    %3 = vector.broadcast %0 : f32 to vector<24x128xf32>
    %4 = arith.mulf %2, %3 : vector<24x128xf32>
    %5 = vector.broadcast %1 : f32 to vector<24x128xf32>
    %6 = arith.addf %4, %5 : vector<24x128xf32>
    %c0_2 = arith.constant 0 : index
    %c0_3 = arith.constant 0 : index
    %7 = vector.load %arg3[%c0_2, %c0_3] : memref<24x128xf32, #tpu.memory_space<vmem>>, vector<24x128xf32>
    tpu.vector_store %arg3[%c0_2, %c0_3], %6 {strides = array<i32>} : memref<24x128xf32, #tpu.memory_space<vmem>>, vector<24x128xf32>,
    return
  }
  func.func @transform_0(%arg0: i32) -> i32 {
    %c0_i32 = arith.constant 0 : i32
    %c0_i32_0 = arith.constant 0 : i32
    return %c0_i32 : i32
  }
  func.func @transform_1(%arg0: i32) -> (i32, i32) {
    %c0_i32 = arith.constant 0 : i32
    %c0_i32_0 = arith.constant 0 : i32
    return %arg0, %c0_i32 : i32, i32
  }
  func.func @transform_2(%arg0: i32) -> (i32, i32) {
    %c0_i32 = arith.constant 0 : i32
    %c0_i32_0 = arith.constant 0 : i32
    return %arg0, %c0_i32 : i32, i32
  }
}

</mosaic_0001>

<llo_original>
// kernel: tpu_custom_call.1
$region0: #{tpu_custom_call.1}
  #allocation0 [shape = 'u32[]', space=smem, size = 0x4, offset = 0x4, fixed_abs, tag = 'smem constant byte address 0x4 - core index']
  #allocation1 [shape = 'u32[144,128]{1,0:T(1,128)}', space=vmem, size = 0x12000, scoped, tag = 'internal scratch']
  %s0 = inlined_call_operand.hbm [shape: f32[2], index: 0, kind: input, shape index: {}]
  %s1 = inlined_call_operand.hbm [shape: f32[40,128], index: 1, kind: input, shape index: {}]
  %s2 = inlined_call_operand.hbm [shape: f32[40,128], index: 2, kind: output, shape index: {}]
  %s3 = sld [smem:[#allocation0]]
  $region49: #{tpu_custom_call.1} parent=0
    _
  %s5 = ssub.s32 1, %s3
  %s6 = scalar_select 0, %s5, %s3
  $region1: #{tpu_custom_call.1} parent=0
    #allocation2 [shape = 'u8[512]{0}', space=smem, size = 0x200, scoped, tag = 'input window, operand 0, single buffered']
    #allocation3 [shape = 's32[2]{0}', space=sflag, size = 0x8, scoped, tag = 'scoped memory for tpu_custom_call.1']
    #allocation4 [shape = 's32[2]{0}', space=sflag, size = 0x8, scoped, tag = 'scoped memory for tpu_custom_call.1']
    #allocation5 [shape = 's32[2]{0}', space=sflag, size = 0x8, scoped, tag = 'scoped memory for tpu_custom_call.1']
    #allocation6 [shape = 'u8[24576]{0}', space=vmem, size = 0x6000, scoped, tag = 'input window, operand 1']
    #allocation7 [shape = 'u8[24576]{0}', space=vmem, size = 0x6000, scoped, tag = 'output window, operand 0']
    %7 = vsyncpa [#allocation5], 0
    %8 = vsyncpa [#allocation3], 0
    %s9 = scalar_lea.sflag [#allocation3], 1
    %10 = vsyncpa %s9, 0
    %11 = vsyncpa [#allocation4], 0
    %s12 = scalar_lea.sflag [#allocation4], 1
    %13 = vsyncpa %s12, 0
    loop: start=0, step=1, limit=4
    $region2: #{tpu_custom_call.1} parent=1 // loop_pre_header
      _
    $region3: #{tpu_custom_call.1} parent=1 // loop_header
      %s15 = sphi 0, %s19
      %p16 = scmp.ge.s32.totalorder %s15, 4
      %s23 = sphi 0, %s23
      %s25 = sphi 0, %s23
      %s26 = sphi 0, %s25
      %s40 = sphi 0, %s26
      %s46 = sphi 0, %s48
      %s49 = sphi 0, %s46
      %s50 = sphi 0, %s49
      %s66 = sphi 0, %s50
      %s72 = sphi 0, %s74
      %s75 = sphi 0, %s72
      %s76 = sphi 0, %s75
      %s92 = sphi 0, %s76
    $region4: #{tpu_custom_call.1} parent=1 // loop_header_branch
      %18 = sbr.rel (%p16) target = $region8
    $region5: #{tpu_custom_call.1} parent=1 // loop_body
      %s20 = ssub.s32 %s15, 1
      %s21 = ssub.s32 %s15, 2
      %s22 = sadd.s32 %s15, 1
      %s24 = sadd.s32 %s23, 1
      %p27 = scmp.eq.s32.totalorder %s15, 1
      %p28 = scmp.ne.s32.totalorder %s23, %s25
      %p29 = scmp.eq.s32.totalorder %s15, 0
      %p30 = por %p28, %p29
      %p31 = scmp.ne.s32.totalorder %s23, %s25
      %p32 = scmp.eq.s32.totalorder %s20, 1
      %p33 = por %p31, %p32
      %p34 = scmp.ne.s32.totalorder %s25, %s26
      %p35 = scmp.eq.s32.totalorder %s20, 0
      %p36 = por %p34, %p35
      %p37 = scmp.ne.s32.totalorder %s25, %s26
      %p38 = scmp.eq.s32.totalorder %s21, 1
      %p39 = por %p37, %p38
      %p41 = scmp.ne.s32.totalorder %s26, %s40
      %p42 = scmp.eq.s32.totalorder %s21, 0
      %p43 = por %p41, %p42
      %s44 = ssub.s32 %s15, %s22
      %p45 = scmp.eq.s32.totalorder %s44, 0
      %s47 = sadd.s32 %s46, 1
      %s48 = scalar_select %p45, %s46, %s47
      %p51 = pneg %p45
      %p52 = scmp.eq.s32.totalorder %s15, 1
      %p53 = por %p51, %p52
      %p54 = scmp.ne.s32.totalorder %s46, %s49
      %p55 = scmp.eq.s32.totalorder %s15, 0
      %p56 = por %p54, %p55
      %p57 = scmp.ne.s32.totalorder %s46, %s49
      %p58 = scmp.eq.s32.totalorder %s20, 1
      %p59 = por %p57, %p58
      %p60 = scmp.ne.s32.totalorder %s49, %s50
      %p61 = scmp.eq.s32.totalorder %s20, 0
      %p62 = por %p60, %p61
      %p63 = scmp.ne.s32.totalorder %s49, %s50
      %p64 = scmp.eq.s32.totalorder %s21, 1
      %p65 = por %p63, %p64
      %p67 = scmp.ne.s32.totalorder %s50, %s66
      %p68 = scmp.eq.s32.totalorder %s21, 0
      %p69 = por %p67, %p68
      %s70 = ssub.s32 %s15, %s22
      %p71 = scmp.eq.s32.totalorder %s70, 0
      %s73 = sadd.s32 %s72, 1
      %s74 = scalar_select %p71, %s72, %s73
      %p77 = pneg %p71
      %p78 = scmp.eq.s32.totalorder %s15, 1
      %p79 = por %p77, %p78
      %p80 = scmp.ne.s32.totalorder %s72, %s75
      %p81 = scmp.eq.s32.totalorder %s15, 0
      %p82 = por %p80, %p81
      %p83 = scmp.ne.s32.totalorder %s72, %s75
      %p84 = scmp.eq.s32.totalorder %s20, 1
      %p85 = por %p83, %p84
      %p86 = scmp.ne.s32.totalorder %s75, %s76
      %p87 = scmp.eq.s32.totalorder %s20, 0
      %p88 = por %p86, %p87
      %p89 = scmp.ne.s32.totalorder %s75, %s76
      %p90 = scmp.eq.s32.totalorder %s21, 1
      %p91 = por %p89, %p90
      %p93 = scmp.ne.s32.totalorder %s76, %s92
      %p94 = scmp.eq.s32.totalorder %s21, 0
      %p95 = por %p93, %p94
      %p96 = scmp.le.s32.totalorder 1, %s15
      %p97 = scmp.lt.s32.totalorder %s15, 3
      %p98 = pnand %p96, %p97
      %p99 = pneg %p98
      // Predicated region
      $region9: #{tpu_custom_call.1} parent=5 // pred_check
        _
      $region10: #{tpu_custom_call.1} parent=5 // pred_check_branch
        %101 = sbr.rel (%p98) target = $region12
      $region11: #{tpu_custom_call.1} parent=5 // pred_region
        %s102 = ssub.s32 %s15, 1
        // Predicated region
        $region13: #{tpu_custom_call.1} parent=11 // pred_check
          %p103 = pneg %p36
        $region14: #{tpu_custom_call.1} parent=11 // pred_check_branch
          %105 = sbr.rel (%p103) target = $region16
        $region15: #{tpu_custom_call.1} parent=11 // pred_region
          %s107 = ssub.s32 16, 16
          %108 = vsyncadd [#allocation5], %s107
          %111 = dma.hbm_to_smem %s0, 16, [#allocation2], [#allocation5]
        $region16: #{tpu_custom_call.1} parent=11 // pred_fallthru
          _
      $region12: #{tpu_custom_call.1} parent=5 // pred_fallthru
        _
      %p112 = scmp.lt.s32.totalorder %s15, 2
      // Predicated region
      $region17: #{tpu_custom_call.1} parent=5 // pred_check
        %p113 = pneg %p112
      $region18: #{tpu_custom_call.1} parent=5 // pred_check_branch
        %115 = sbr.rel (%p113) target = $region20
      $region19: #{tpu_custom_call.1} parent=5 // pred_region
        // Predicated region
        $region21: #{tpu_custom_call.1} parent=19 // pred_check
          %p116 = pneg %p56
        $region22: #{tpu_custom_call.1} parent=19 // pred_check_branch
          %118 = sbr.rel (%p116) target = $region24
        $region23: #{tpu_custom_call.1} parent=19 // pred_region
          %s119 = sand.u32 %s46, 1
          %s120 = scalar_lea.sflag [#allocation3], %s119
          %s121 = sand.u32 %s46, 1
          %s122 = smul.addr %s121, 24
          %s123 = scalar_lea.vmem [#allocation6], %s122
          %s124 = smul.u32 3, %s15
          %s125 = ssub.s32 5, %s124
          %p126 = scmp.lt.s32.totalorder %s125, 3
          %s127 = scalar_select %p126, %s125, 3
          %s128 = smul.u32 128, %s127
          %s130 = ssub.s32 384, %s128
          %131 = vsyncadd %s120, %s130
          %p132 = scmp.ne.s32.totalorder 0, %s128
          %s133 = smul.addr %s124, 128
          %s134 = scalar_lea.hbm %s1, %s133
          %s135 = smul.u32 8, %s127
          %s136 = sshll.u32 %s123, 4
          %s137 = int_to_ptr.vmem [resolvable:$true] %s136
          %s138 = sshll.u32 %s135, 4
          %142 = dma.hbm_to_vmem [thread:$0]  (%p132), %s134, %s138, %s137, %s120, 128, 128, 8
        $region24: #{tpu_custom_call.1} parent=19 // pred_fallthru
          _
      $region20: #{tpu_custom_call.1} parent=5 // pred_fallthru
        _
      %p143 = scmp.le.s32.totalorder 1, %s15
      %p144 = scmp.lt.s32.totalorder %s15, 3
      %p145 = pnand %p143, %p144
      %p146 = pneg %p145
      // Predicated region
      $region25: #{tpu_custom_call.1} parent=5 // pred_check
        _
      $region26: #{tpu_custom_call.1} parent=5 // pred_check_branch
        %148 = sbr.rel (%p145) target = $region28
      $region27: #{tpu_custom_call.1} parent=5 // pred_region
        %s149 = ssub.s32 %s15, 1
        // Predicated region
        $region29: #{tpu_custom_call.1} parent=27 // pred_check
          %p150 = pneg %p36
        $region30: #{tpu_custom_call.1} parent=27 // pred_check_branch
          %152 = sbr.rel (%p150) target = $region32
        $region31: #{tpu_custom_call.1} parent=27 // pred_region
          %153 = dma.done [#allocation5], 16
        $region32: #{tpu_custom_call.1} parent=27 // pred_fallthru
          _
        %s154 = sand.u32 %s49, 1
        %s155 = scalar_lea.sflag [#allocation3], %s154
        %s156 = sand.u32 %s49, 1
        %s157 = smul.addr %s156, 24
        %s158 = scalar_lea.vmem [#allocation6], %s157
        // Predicated region
        $region33: #{tpu_custom_call.1} parent=27 // pred_check
          %p159 = pneg %p62
        $region34: #{tpu_custom_call.1} parent=27 // pred_check_branch
          %161 = sbr.rel (%p159) target = $region36
        $region35: #{tpu_custom_call.1} parent=27 // pred_region
          %162 = dma.done %s155, 384
        $region36: #{tpu_custom_call.1} parent=27 // pred_fallthru
          _
        %163 = sfence
        %p164 = pneg %p36
        %p165 = pneg %p33
        %s166 = sand.u32 %s49, 1
        %s167 = scalar_lea.sflag [#allocation3], %s166
        %s168 = sand.u32 %s49, 1
        %s169 = smul.addr %s168, 24
        %s170 = scalar_lea.vmem [#allocation6], %s169
        %p171 = pneg %p62
        %p172 = pneg %p59
        %p173 = pneg %p88
        %p174 = pneg %p85
        %s175 = sand.u32 %s75, 1
        %s176 = scalar_lea.sflag [#allocation4], %s175
        %s177 = sand.u32 %s75, 1
        %s178 = smul.addr %s177, 24
        %s179 = scalar_lea.vmem [#allocation7], %s178
        %s180 = smul.u32 3, %s20
        %s181 = ssub.s32 5, %s180
        %p182 = scmp.lt.s32.totalorder %s181, 3
        %s183 = scalar_select %p182, %s181, 3
        %s184 = smul.u32 128, %s183
        %s185 = smul.u32 3, %s20
        %s186 = ssub.s32 5, %s185
        %p187 = scmp.lt.s32.totalorder %s186, 3
        %s188 = scalar_select %p187, %s186, 3
        %s189 = smul.u32 128, %s188
        %s190 = sld [smem:[#allocation2]]
        %s191 = sld [smem:[#allocation2 + $0x1]]
        %v192 = vld [vmem:[%s158] sm:$0xff]
        %v193 = vld [vmem:[%s158 + $0x8] sm:$0xff]
        %v194 = vld [vmem:[%s158 + $0x10] sm:$0xff]
        %v195 = vstv %s190
        %v196 = vmul.f32 %v192, %v195
        %v197 = vmul.f32 %v193, %v195
        %v198 = vmul.f32 %v194, %v195
        %v199 = vstv %s191
        %v200 = vadd.f32 %v196, %v199
        %v201 = vadd.f32 %v197, %v199
        %v202 = vadd.f32 %v198, %v199
        %203 = vst [vmem:[%s179] sm:$0xff] %v200
        %204 = vst [vmem:[%s179 + $0x8] sm:$0xff] %v201
        %205 = vst [vmem:[%s179 + $0x10] sm:$0xff] %v202
        %s206 = sand.u32 %s75, 1
        %s207 = scalar_lea.sflag [#allocation4], %s206
        %s208 = sand.u32 %s75, 1
        %s209 = smul.addr %s208, 24
        %s210 = scalar_lea.vmem [#allocation7], %s209
        // Predicated region
        $region37: #{tpu_custom_call.1} parent=27 // pred_check
          %p211 = pneg %p85
        $region38: #{tpu_custom_call.1} parent=27 // pred_check_branch
          %213 = sbr.rel (%p211) target = $region40
        $region39: #{tpu_custom_call.1} parent=27 // pred_region
          %s214 = smul.u32 3, %s20
          %s215 = ssub.s32 5, %s214
          %p216 = scmp.lt.s32.totalorder %s215, 3
          %s217 = scalar_select %p216, %s215, 3
          %s218 = smul.u32 128, %s217
          %s220 = ssub.s32 384, %s218
          %221 = vsyncadd %s207, %s220
          %p222 = scmp.ne.s32.totalorder 0, %s218
          %s223 = smul.addr %s214, 128
          %s224 = scalar_lea.hbm %s2, %s223
          %s225 = smul.u32 8, %s217
          %s226 = sshll.u32 %s210, 4
          %s227 = int_to_ptr.vmem [resolvable:$true] %s226
          %s228 = sshll.u32 %s225, 4
          %232 = dma.vmem_to_hbm [thread:$0]  (%p222), %s227, %s228, %s224, %s207, 128, 128, 8
        $region40: #{tpu_custom_call.1} parent=27 // pred_fallthru
          _
      $region28: #{tpu_custom_call.1} parent=5 // pred_fallthru
        _
      %p233 = scmp.le.s32.totalorder 2, %s15
      // Predicated region
      $region41: #{tpu_custom_call.1} parent=5 // pred_check
        %p234 = pneg %p233
      $region42: #{tpu_custom_call.1} parent=5 // pred_check_branch
        %236 = sbr.rel (%p234) target = $region44
      $region43: #{tpu_custom_call.1} parent=5 // pred_region
        %s237 = ssub.s32 %s15, 2
        // Predicated region
        $region45: #{tpu_custom_call.1} parent=43 // pred_check
          %p238 = pneg %p91
        $region46: #{tpu_custom_call.1} parent=43 // pred_check_branch
          %240 = sbr.rel (%p238) target = $region48
        $region47: #{tpu_custom_call.1} parent=43 // pred_region
          %s241 = sand.u32 %s76, 1
          %s242 = scalar_lea.sflag [#allocation4], %s241
          %s243 = sand.u32 %s76, 1
          %s244 = smul.addr %s243, 24
          %s245 = scalar_lea.vmem [#allocation7], %s244
          %246 = dma.done %s242, 384
        $region48: #{tpu_custom_call.1} parent=43 // pred_fallthru
          _
      $region44: #{tpu_custom_call.1} parent=5 // pred_fallthru
        _
    $region6: #{tpu_custom_call.1} parent=1 // loop_footer
      %s19 = sadd.s32 1, %s15
    $region7: #{tpu_custom_call.1} parent=1 // loop_footer_branch
      %14 = sbr.rel target = $region3
    $region8: #{tpu_custom_call.1} parent=1 // loop_exit
      _
    %247 = vsyncpa [#allocation3], 1
    %s248 = scalar_lea.sflag [#allocation3], 1
    %249 = vsyncpa %s248, 1
    %250 = vsyncpa [#allocation4], 1
    %s251 = scalar_lea.sflag [#allocation4], 1
    %252 = vsyncpa %s251, 1
    %253 = vsyncpa [#allocation5], 1
    %s254 = scalar_lea.sflag [#allocation5], 1
    %255 = vsyncpa %s254, 1

</llo_original>
